<compile_context>
chip_gen: v7x
topology: tpu7x:2x2x1
jax: 0.10.0
libtpu: 0.0.40
codegen_flags: <defaults>
</compile_context>

<pallas_src>
import functools

import jax
import jax.numpy as jnp
from jax import lax
from jax.experimental import pallas as pl
from jax.experimental.pallas import tpu as pltpu


# ----------------------------------------------------------------------------
# Fused Pallas kernel: ConvLSTM cell (3x3 "same" conv via roll + mask),
# spatial mean pool, BatchNorm1d (eval) + Linear + ReLU + Linear head.
# grid = (B, T); h/c live in VMEM scratch; logits accumulate in a resident
# (1, 1, T) output block (flushed once per batch element).
# ----------------------------------------------------------------------------
def convlstm_head_kernel(x_ref, m_ref, wx_ref, wh_ref, b_ref,
                         bns_ref, bnb_ref, w1_ref, b1_ref, w2_ref, b2_ref,
                         out_ref, h_scr, c_scr, *, shifts, hid):
    t = pl.program_id(1)

    @pl.when(t == 0)
    def _():
        h_scr[...] = jnp.zeros_like(h_scr)
        c_scr[...] = jnp.zeros_like(c_scr)
        out_ref[...] = jnp.zeros_like(out_ref)

    x = x_ref[0, 0]                      # (Nb, Cf)  backbone features at (b, t)
    h = h_scr[...]                       # (Nb, hid)
    c = c_scr[...]                       # (Nb, hid)
    n_rows = x.shape[0]

    # conv(concat([x, h])) with padding=1: 9 taps, each = sublane roll of the
    # activation + boundary mask + per-tap weight matmul (MXU).
    acc = jnp.zeros((n_rows, 4 * hid), jnp.float32) + b_ref[...]
    for k, s in enumerate(shifts):
        if s == 0:                       # centre tap: no shift, mask all-ones
            xs, hs = x, h
        else:
            m = m_ref[k]                 # (Nb, 1) 0/1 spatial-boundary mask
            xs = pltpu.roll(x, shift=s, axis=0) * m
            hs = pltpu.roll(h, shift=s, axis=0) * m
        acc = acc + jnp.dot(xs, wx_ref[k], preferred_element_type=jnp.float32)
        acc = acc + jnp.dot(hs, wh_ref[k], preferred_element_type=jnp.float32)

    i = jax.nn.sigmoid(acc[:, 0 * hid:1 * hid])
    f = jax.nn.sigmoid(acc[:, 1 * hid:2 * hid])
    o = jax.nn.sigmoid(acc[:, 2 * hid:3 * hid])
    g = jnp.tanh(acc[:, 3 * hid:4 * hid])

    c_next = f * c + i * g
    h_next = o * jnp.tanh(c_next)
    h_scr[...] = h_next
    c_scr[...] = c_next

    # spatial mean pool (== torch .mean(dim=[3,4])) over the Nb rows -> (1, hid)
    pool_vec = jnp.full((1, n_rows), 1.0 / n_rows, dtype=jnp.float32)
    pooled = jnp.dot(pool_vec, h_next, preferred_element_type=jnp.float32)

    # fused head: BatchNorm1d (eval) + Linear(hid,64) + ReLU + Linear(64,1)
    y = pooled * bns_ref[...] + bnb_ref[...]
    h1 = jnp.dot(y, w1_ref[...], preferred_element_type=jnp.float32) + b1_ref[...]
    h1 = jnp.maximum(h1, 0.0)
    logit = (jnp.dot(h1, w2_ref[...], preferred_element_type=jnp.float32)
             + b2_ref[...])                                   # (1, 1)

    # write logit into column t of the resident (1, 1, T) output block
    t_len = out_ref.shape[-1]
    col = lax.broadcasted_iota(jnp.int32, (1, 1, t_len), 2)
    out_ref[...] = jnp.where(col == t, logit.reshape(1, 1, 1), out_ref[...])


# ----------------------------------------------------------------------------
# Glue: roll-direction probe, tap masks/shifts, params, wrappers, reference.
# ----------------------------------------------------------------------------
@functools.lru_cache(maxsize=None)
def _roll_dir():
    """+1 if pltpu.roll matches jnp.roll semantics, else -1.

    Tiny one-off probe so the tap shifts stay correct regardless of the
    rotate-direction convention of the underlying hardware rotate op.
    """
    def k(x_ref, o_ref):
        o_ref[...] = pltpu.roll(x_ref[...], shift=1, axis=0)
    x = jnp.arange(8 * 128, dtype=jnp.int32).reshape(8, 128)
    out = pl.pallas_call(
        k, out_shape=jax.ShapeDtypeStruct((8, 128), jnp.int32))(x)
    return 1 if bool(jnp.array_equal(out, jnp.roll(x, 1, axis=0))) else -1


def build_tap_masks_and_shifts(Hf, Wf, roll_dir):
    """Masks (9, Hf*Wf, 1) and static sublane roll amounts for the 9 taps."""
    Nb = Hf * Wf
    ys, xs = jnp.meshgrid(jnp.arange(Hf), jnp.arange(Wf), indexing="ij")
    masks, shifts = [], []
    for ky in range(3):
        for kx in range(3):
            dy, dx = ky - 1, kx - 1
            d = dy * Wf + dx                       # row offset of this tap
            valid = ((ys + dy >= 0) & (ys + dy < Hf) &
                     (xs + dx >= 0) & (xs + dx < Wf))
            masks.append(valid.reshape(Nb, 1).astype(jnp.float32))
            shifts.append(int((-d * roll_dir) % Nb))
    return jnp.stack(masks), tuple(shifts)         # (9, Nb, 1), len-9 tuple


def init_params(key, C, Cf, hid):
    k = jax.random.split(key, 11)
    nrm = jax.random.normal
    params = {
        "backbone_w": 0.2 * nrm(k[0], (3, 3, C, Cf), jnp.float32),
        "backbone_b": 0.1 * nrm(k[1], (Cf,), jnp.float32),
        "wx9": (0.15 * nrm(k[2], (3, 3, Cf, 4 * hid), jnp.float32)
                ).reshape(9, Cf, 4 * hid),
        "wh9": (0.15 * nrm(k[3], (3, 3, hid, 4 * hid), jnp.float32)
                ).reshape(9, hid, 4 * hid),
        "bias": 0.1 * nrm(k[4], (1, 4 * hid), jnp.float32),
        "w1": 0.2 * nrm(k[7], (hid, 64), jnp.float32),
        "b1": 0.1 * nrm(k[8], (1, 64), jnp.float32),
        "w2": 0.2 * nrm(k[9], (64, 1), jnp.float32),
        "b2": 0.1 * nrm(k[10], (1, 1), jnp.float32),
    }
    gamma = 1.0 + 0.1 * nrm(k[5], (hid,), jnp.float32)
    beta = 0.1 * nrm(k[6], (hid,), jnp.float32)
    run_mean = jnp.zeros((hid,), jnp.float32)
    run_var = jnp.ones((hid,), jnp.float32)
    eps = 1e-5
    scale = gamma / jnp.sqrt(run_var + eps)
    params["bn_scale"] = scale.reshape(1, hid)
    params["bn_shift"] = (beta - run_mean * scale).reshape(1, hid)
    return params


def backbone_features(x, params):
    # TODO(synk): stand-in for the YOLO backbone (external checkpoint).
    B, T, C, H, W = x.shape
    x_in = x.reshape(B * T, C, H, W).transpose(0, 2, 3, 1)        # NHWC
    feats = lax.conv_general_dilated(
        x_in, params["backbone_w"], (2, 2), "SAME",
        dimension_numbers=("NHWC", "HWIO", "NHWC")) + params["backbone_b"]
    return jax.nn.silu(feats)                                      # (B*T,Hf,Wf,Cf)


def model_forward(x, params):
    B, T, C, H, W = x.shape
    Cf = params["backbone_w"].shape[-1]
    hid = params["wh9"].shape[1]

    feats = backbone_features(x, params)           # (B*T, Hf, Wf, Cf)
    _, Hf, Wf, _ = feats.shape
    Nb = Hf * Wf

    x4d = feats.reshape(B, T, Nb, Cf)              # per-batch row-flattened maps
    masks, shifts = build_tap_masks_and_shifts(Hf, Wf, _roll_dir())

    kernel = functools.partial(convlstm_head_kernel, shifts=shifts, hid=hid)

    logits = pl.pallas_call(
        kernel,
        out_shape=jax.ShapeDtypeStruct((B, 1, T), jnp.float32),
        grid_spec=pltpu.PrefetchScalarGridSpec(
            num_scalar_prefetch=0,
            grid=(B, T),
            in_specs=[
                pl.BlockSpec((1, 1, Nb, Cf), lambda b, t: (b, t, 0, 0)),
                pl.BlockSpec((9, Nb, 1), lambda b, t: (0, 0, 0)),
                pl.BlockSpec((9, Cf, 4 * hid), lambda b, t: (0, 0, 0)),
                pl.BlockSpec((9, hid, 4 * hid), lambda b, t: (0, 0, 0)),
                pl.BlockSpec((1, 4 * hid), lambda b, t: (0, 0)),
                pl.BlockSpec((1, hid), lambda b, t: (0, 0)),
                pl.BlockSpec((1, hid), lambda b, t: (0, 0)),
                pl.BlockSpec((hid, 64), lambda b, t: (0, 0)),
                pl.BlockSpec((1, 64), lambda b, t: (0, 0)),
                pl.BlockSpec((64, 1), lambda b, t: (0, 0)),
                pl.BlockSpec((1, 1), lambda b, t: (0, 0)),
            ],
            out_specs=pl.BlockSpec((1, 1, T), lambda b, t: (b, 0, 0)),
            scratch_shapes=[
                pltpu.VMEM((Nb, hid), jnp.float32),   # h state (per core)
                pltpu.VMEM((Nb, hid), jnp.float32),   # c state (per core)
            ],
        ),
        compiler_params=pltpu.CompilerParams(
            dimension_semantics=("parallel", "arbitrary")),
    )(x4d, masks, params["wx9"], params["wh9"], params["bias"],
      params["bn_scale"], params["bn_shift"],
      params["w1"], params["b1"], params["w2"], params["b2"])

    return logits.reshape(B, T)                     # (b, seq_len)


def reference_forward(x, params):
    """Pure-JAX reference (same math, lax.conv formulation)."""
    B, T, C, H, W = x.shape
    Cf = params["backbone_w"].shape[-1]
    hid = params["wh9"].shape[1]
    feats = backbone_features(x, params)
    _, Hf, Wf, _ = feats.shape
    feats = feats.reshape(B, T, Hf, Wf, Cf)
    wx = params["wx9"].reshape(3, 3, Cf, 4 * hid)
    wh = params["wh9"].reshape(3, 3, hid, 4 * hid)
    w_full = jnp.concatenate([wx, wh], axis=2)
    h = jnp.zeros((B, Hf, Wf, hid), jnp.float32)
    c = jnp.zeros_like(h)
    pooled = []
    for t in range(T):
        inp = jnp.concatenate([feats[:, t], h], axis=-1)
        gates = lax.conv_general_dilated(
            inp, w_full, (1, 1), "SAME",
            dimension_numbers=("NHWC", "HWIO", "NHWC")
        ) + params["bias"].reshape(1, 1, 1, -1)
        i = jax.nn.sigmoid(gates[..., 0 * hid:1 * hid])
        f = jax.nn.sigmoid(gates[..., 1 * hid:2 * hid])
        o = jax.nn.sigmoid(gates[..., 2 * hid:3 * hid])
        g = jnp.tanh(gates[..., 3 * hid:4 * hid])
        c = f * c + i * g
        h = o * jnp.tanh(c)
        pooled.append(h.mean(axis=(1, 2)))
    pooled = jnp.stack(pooled, axis=1)                  # (B, T, hid)
    y = pooled * params["bn_scale"] + params["bn_shift"]
    h1 = jnp.maximum(y @ params["w1"] + params["b1"], 0.0)
    return (h1 @ params["w2"] + params["b2"])[..., 0]   # (B, T)


if __name__ == "__main__":
    B, T, C, H, W = 2, 8, 3, 16, 16          # small shapes; img_size == 16
    Cf, hid = 8, 32                          # C_feat / hidden_dim (synthetic)

    key = jax.random.PRNGKey(0)
    kp, kx = jax.random.split(key)
    params = init_params(kp, C, Cf, hid)
    x = jax.random.normal(kx, (B, T, C, H, W), jnp.float32)

    logits = model_forward(x, params)
    jax.block_until_ready(logits)

    ref = reference_forward(x, params)
    assert logits.shape == (B, T), logits.shape
    max_err = float(jnp.max(jnp.abs(logits - ref)))
    if max_err > 3e-3:
        raise AssertionError(f"mismatch vs reference: max_err={max_err}")
    print("KERNEL_OK")
</pallas_src>

<mosaic_0001>
module attributes {stable_mosaic.version = 11 : i64} {
  func.func @k(%arg0: memref<8x128xi32, #tpu.memory_space<vmem>>, %arg1: memref<8x128xi32, #tpu.memory_space<vmem>>) attributes {dimension_semantics = [], scalar_prefetch = 0 : i64, scratch_operands = 0 : i64, tpu.core_type = #tpu.core_type<tc>} {
    %c0 = arith.constant 0 : index
    %c0_0 = arith.constant 0 : index
    %0 = vector.load %arg0[%c0, %c0_0] : memref<8x128xi32, #tpu.memory_space<vmem>>, vector<8x128xi32>
    %c1_i32 = arith.constant 1 : i32
    %1 = tpu.dynamic_rotate %0 by %c1_i32 dim 0 : vector<8x128xi32>, i32 -> vector<8x128xi32>
    %c0_1 = arith.constant 0 : index
    %c0_2 = arith.constant 0 : index
    %2 = vector.load %arg1[%c0_1, %c0_2] : memref<8x128xi32, #tpu.memory_space<vmem>>, vector<8x128xi32>
    tpu.vector_store %arg1[%c0_1, %c0_2], %1 {strides = array<i32>} : memref<8x128xi32, #tpu.memory_space<vmem>>, vector<8x128xi32>,
    return
  }
}

</mosaic_0001>

<llo_original>
// kernel: tpu_custom_call.1
$region0: #{tpu_custom_call.1}
  #allocation0 [shape = 'u32[]', space=smem, size = 0x4, offset = 0x4, fixed_abs, tag = 'smem constant byte address 0x4 - core index']
  #allocation1 [shape = 'u32[144,128]{1,0:T(1,128)}', space=vmem, size = 0x12000, scoped, tag = 'internal scratch']
  %s0 = inlined_call_operand.hbm [shape: s32[8,128], index: 0, kind: input, shape index: {}]
  %s1 = inlined_call_operand.hbm [shape: s32[8,128], index: 1, kind: output, shape index: {}]
  %s2 = sld [smem:[#allocation0]]
  $region18: #{tpu_custom_call.1} parent=0
    _
  %s4 = ssub.s32 1, %s2
  %s5 = scalar_select 0, %s4, %s2
  $region1: #{tpu_custom_call.1} parent=0
    #allocation2 [shape = 'u8[4096]{0}', space=vmem, size = 0x1000, scoped, tag = 'input window, operand 0, single buffered']
    #allocation3 [shape = 's32[1]{0}', space=sflag, size = 0x4, scoped, tag = 'scoped memory for tpu_custom_call.1']
    #allocation4 [shape = 's32[1]{0}', space=sflag, size = 0x4, scoped, tag = 'scoped memory for tpu_custom_call.1']
    #allocation5 [shape = 'u8[4096]{0}', space=vmem, size = 0x1000, scoped, tag = 'output window, operand 0, single buffered']
    %6 = vsyncpa [#allocation3], 0
    %7 = vsyncpa [#allocation4], 0
    // Predicated region
    $region2: #{tpu_custom_call.1} parent=1 // pred_check
      _
    $region3: #{tpu_custom_call.1} parent=1 // pred_check_branch
      %9 = sbr.rel (0) target = $region5
    $region4: #{tpu_custom_call.1} parent=1 // pred_region
      %s11 = ssub.s32 128, 128
      %12 = vsyncadd [#allocation3], %s11
      %s14 = sshll.u32 [#allocation2], 4
      %s15 = int_to_ptr.vmem [resolvable:$true] %s14
      %17 = dma.hbm_to_vmem [thread:$0]  %s0, 128, %s15, [#allocation3]
    $region5: #{tpu_custom_call.1} parent=1 // pred_fallthru
      _
    // Predicated region
    $region6: #{tpu_custom_call.1} parent=1 // pred_check
      _
    $region7: #{tpu_custom_call.1} parent=1 // pred_check_branch
      %19 = sbr.rel (0) target = $region9
    $region8: #{tpu_custom_call.1} parent=1 // pred_region
      %20 = dma.done [#allocation3], 128
    $region9: #{tpu_custom_call.1} parent=1 // pred_fallthru
      _
    %v21 = vld [vmem:[#allocation2] sm:$0xff]
    %v22 = vrot.slane %v21, 7
    %23 = vst [vmem:[#allocation5] sm:$0xff] %v22
    // Predicated region
    $region10: #{tpu_custom_call.1} parent=1 // pred_check
      _
    $region11: #{tpu_custom_call.1} parent=1 // pred_check_branch
      %25 = sbr.rel (0) target = $region13
    $region12: #{tpu_custom_call.1} parent=1 // pred_region
      %s27 = ssub.s32 128, 128
      %28 = vsyncadd [#allocation4], %s27
      %s30 = sshll.u32 [#allocation5], 4
      %s31 = int_to_ptr.vmem [resolvable:$true] %s30
      %33 = dma.vmem_to_hbm [thread:$0]  %s31, 128, %s1, [#allocation4]
    $region13: #{tpu_custom_call.1} parent=1 // pred_fallthru
      _
    // Predicated region
    $region14: #{tpu_custom_call.1} parent=1 // pred_check
      _
    $region15: #{tpu_custom_call.1} parent=1 // pred_check_branch
      %35 = sbr.rel (0) target = $region17
    $region16: #{tpu_custom_call.1} parent=1 // pred_region
      %36 = dma.done [#allocation4], 128
    $region17: #{tpu_custom_call.1} parent=1 // pred_fallthru
      _
    %37 = vsyncpa [#allocation3], 1
    %38 = vsyncpa [#allocation4], 1

</llo_original>
